<compile_context>
chip_gen: v7x
topology: tpu7x:2x2x1
jax: 0.10.0
libtpu: 0.0.40
codegen_flags: <defaults>
</compile_context>

<pallas_src>
import jax
import jax.numpy as jnp
from jax.experimental import pallas as pl
from jax.experimental.pallas import tpu as pltpu

_LANES = 128      # lane width of a vreg
_TM = 1024        # rows per tile -> 1024 * 128 * 4 B = 512 KiB per buffer


def _affine_kernel(ac_ref, x_ref, o_ref):
    # ac_ref: (2,) f32 in SMEM  -> [a, c]
    # x_ref / o_ref: (TM, 128) lane-dense tiles in VMEM
    a = ac_ref[0]
    c = ac_ref[1]
    o_ref[...] = (x_ref[...].astype(jnp.float32) * a + c).astype(o_ref.dtype)


def linear2_forward(x, w1, b1, w2, b2):
    """Forward pass of the two-layer linear module.

    x : (B, 1) f32
    w1: (1, 3)  = linear1.weight.T   (in, out)
    b1: (1, 3)  = linear1.bias
    w2: (3, 1)  = linear2.weight.T   (in, out)
    b2: (1, 1)  = linear2.bias
    returns (B, 1) f32
    """
    B = x.shape[0]
    dtype = x.dtype

    # ---- Fold the two affine layers into a single scalar affine (exact). ----
    a = (w1.reshape(1, 3) @ w2.reshape(3, 1)).reshape(())           # scalar scale
    c = (b1.reshape(1, 3) @ w2.reshape(3, 1)).reshape(()) \
        + b2.reshape(())                                            # scalar offset
    ac = jnp.stack([a, c]).astype(jnp.float32)                      # (2,) -> SMEM

    # ---- Lane-dense layout: (B, 1) -> (rows_padded, 128). ----
    rows = pl.cdiv(B, _LANES)
    tm = min(rows, _TM)                       # either full array or multiple of 8
    rows_p = pl.cdiv(rows, tm) * tm
    n_pad = rows_p * _LANES - B
    x_flat = jnp.pad(x.reshape(-1), (0, n_pad)).reshape(rows_p, _LANES)

    grid = (rows_p // tm,)
    out = pl.pallas_call(
        _affine_kernel,
        out_shape=jax.ShapeDtypeStruct((rows_p, _LANES), dtype),
        grid=grid,
        in_specs=[
            pl.BlockSpec(memory_space=pltpu.MemorySpace.SMEM),      # fused a, c
            pl.BlockSpec((tm, _LANES), lambda i: (i, 0)),           # x tile
        ],
        out_specs=pl.BlockSpec((tm, _LANES), lambda i: (i, 0)),
        compiler_params=pltpu.CompilerParams(
            dimension_semantics=("parallel",)),                     # v7x: 2 TCs
    )(ac, x_flat)

    # Strip padding, restore (B, 1).
    return out.reshape(-1)[:B].reshape(B, 1)


def init_params(key):
    """Deterministic init mimicking torch.nn.Linear (uniform +-1/sqrt(fan_in))."""
    k1, k2, k3, k4 = jax.random.split(key, 4)
    # linear1: Linear(1, 3) -> weight (3, 1), bias (3,)
    bound1 = 1.0  # 1/sqrt(1)
    w1_t = jax.random.uniform(k1, (3, 1), jnp.float32, -bound1, bound1)
    b1 = jax.random.uniform(k2, (3,), jnp.float32, -bound1, bound1)
    # linear2: Linear(3, 1) -> weight (1, 3), bias (1,)
    bound2 = 1.0 / jnp.sqrt(3.0)
    w2_t = jax.random.uniform(k3, (1, 3), jnp.float32, -bound2, bound2)
    b2 = jax.random.uniform(k4, (1,), jnp.float32, -bound2, bound2)
    # Pass transposed (in, out) weights and 2-D biases to the wrapper.
    return (w1_t.T, b1.reshape(1, 3), w2_t.T, b2.reshape(1, 1))


if __name__ == "__main__":
    key = jax.random.PRNGKey(0)
    kx, kp = jax.random.split(key)
    w1, b1, w2, b2 = init_params(kp)

    # Small primary check (matches module spec: batch of scalars).
    B = 8
    x = jax.random.normal(kx, (B, 1), jnp.float32)
    out = jax.block_until_ready(linear2_forward(x, w1, b1, w2, b2))
    ref = (x @ w1 + b1) @ w2 + b2
    assert out.shape == (B, 1)
    assert jnp.allclose(out, ref, atol=1e-5, rtol=1e-5)

    # Secondary check: batch that needs lane padding (exercises pad/unpad path).
    B2 = 1000
    x2 = jax.random.normal(jax.random.PRNGKey(1), (B2, 1), jnp.float32)
    out2 = jax.block_until_ready(linear2_forward(x2, w1, b1, w2, b2))
    ref2 = (x2 @ w1 + b1) @ w2 + b2
    assert out2.shape == (B2, 1)
    assert jnp.allclose(out2, ref2, atol=1e-5, rtol=1e-5)

    print("KERNEL_OK")
</pallas_src>

<mosaic_0001>
module attributes {stable_mosaic.version = 11 : i64} {
  func.func @_affine_kernel(%arg0: i32, %arg1: memref<2xf32, #tpu.memory_space<smem>>, %arg2: memref<1x128xf32, #tpu.memory_space<vmem>>, %arg3: memref<1x128xf32, #tpu.memory_space<vmem>>) attributes {dimension_semantics = [#tpu.dimension_semantics<parallel>], iteration_bounds = array<i64: 1>, scalar_prefetch = 0 : i64, scratch_operands = 0 : i64, tpu.core_type = #tpu.core_type<tc>, window_params = [{transform_indices = @transform_0, window_bounds = array<i64: 2>}, {transform_indices = @transform_1, window_bounds = array<i64: 1, 128>}, {transform_indices = @transform_2, window_bounds = array<i64: 1, 128>}]} {
    %c0 = arith.constant 0 : index
    %0 = memref.load %arg1[%c0] : memref<2xf32, #tpu.memory_space<smem>>
    %c1 = arith.constant 1 : index
    %1 = memref.load %arg1[%c1] : memref<2xf32, #tpu.memory_space<smem>>
    %c0_0 = arith.constant 0 : index
    %c0_1 = arith.constant 0 : index
    %2 = vector.load %arg2[%c0_0, %c0_1] : memref<1x128xf32, #tpu.memory_space<vmem>>, vector<1x128xf32>
    %3 = vector.broadcast %0 : f32 to vector<1x128xf32>
    %4 = arith.mulf %2, %3 : vector<1x128xf32>
    %5 = vector.broadcast %1 : f32 to vector<1x128xf32>
    %6 = arith.addf %4, %5 : vector<1x128xf32>
    %c0_2 = arith.constant 0 : index
    %c0_3 = arith.constant 0 : index
    %7 = vector.load %arg3[%c0_2, %c0_3] : memref<1x128xf32, #tpu.memory_space<vmem>>, vector<1x128xf32>
    tpu.vector_store %arg3[%c0_2, %c0_3], %6 {strides = array<i32>} : memref<1x128xf32, #tpu.memory_space<vmem>>, vector<1x128xf32>,
    return
  }
  func.func @transform_0(%arg0: i32) -> i32 {
    %c0_i32 = arith.constant 0 : i32
    %c0_i32_0 = arith.constant 0 : i32
    return %c0_i32 : i32
  }
  func.func @transform_1(%arg0: i32) -> (i32, i32) {
    %c0_i32 = arith.constant 0 : i32
    %c0_i32_0 = arith.constant 0 : i32
    return %arg0, %c0_i32 : i32, i32
  }
  func.func @transform_2(%arg0: i32) -> (i32, i32) {
    %c0_i32 = arith.constant 0 : i32
    %c0_i32_0 = arith.constant 0 : i32
    return %arg0, %c0_i32 : i32, i32
  }
}

</mosaic_0001>

<llo_original>
// kernel: tpu_custom_call.1
$region0: #{tpu_custom_call.1}
  #allocation0 [shape = 'u32[]', space=smem, size = 0x4, offset = 0x4, fixed_abs, tag = 'smem constant byte address 0x4 - core index']
  #allocation1 [shape = 'u32[144,128]{1,0:T(1,128)}', space=vmem, size = 0x12000, scoped, tag = 'internal scratch']
  %s0 = inlined_call_operand.hbm [shape: f32[2], index: 0, kind: input, shape index: {}]
  %s1 = inlined_call_operand.vmem [shape: f32[1,128], index: 1, kind: input, shape index: {}]
  %s2 = inlined_call_operand.hbm [shape: f32[1,128], index: 2, kind: output, shape index: {}]
  %s3 = sld [smem:[#allocation0]]
  $region22: #{tpu_custom_call.1} parent=0
    _
  %s5 = ssub.s32 1, %s3
  %s6 = scalar_select 0, %s5, %s3
  $region1: #{tpu_custom_call.1} parent=0
    #allocation2 [shape = 'u8[512]{0}', space=smem, size = 0x200, scoped, tag = 'input window, operand 0, single buffered']
    #allocation3 [shape = 's32[1]{0}', space=sflag, size = 0x4, scoped, tag = 'scoped memory for tpu_custom_call.1']
    #allocation4 [shape = 's32[1]{0}', space=sflag, size = 0x4, scoped, tag = 'scoped memory for tpu_custom_call.1']
    #allocation5 [shape = 'u8[512]{0}', space=vmem, size = 0x400, scoped, tag = 'output window, operand 0, single buffered']
    %7 = vsyncpa [#allocation4], 0
    %8 = vsyncpa [#allocation3], 0
    // Predicated region
    $region2: #{tpu_custom_call.1} parent=1 // pred_check
      _
    $region3: #{tpu_custom_call.1} parent=1 // pred_check_branch
      %10 = sbr.rel (0) target = $region5
    $region4: #{tpu_custom_call.1} parent=1 // pred_region
      %s12 = ssub.s32 16, 16
      %13 = vsyncadd [#allocation4], %s12
      %16 = dma.hbm_to_smem %s0, 16, [#allocation2], [#allocation4]
    $region5: #{tpu_custom_call.1} parent=1 // pred_fallthru
      _
    // Predicated region
    $region6: #{tpu_custom_call.1} parent=1 // pred_check
      _
    $region7: #{tpu_custom_call.1} parent=1 // pred_check_branch
      %18 = sbr.rel (0) target = $region9
    $region8: #{tpu_custom_call.1} parent=1 // pred_region
      _
    $region9: #{tpu_custom_call.1} parent=1 // pred_fallthru
      _
    // Predicated region
    $region10: #{tpu_custom_call.1} parent=1 // pred_check
      _
    $region11: #{tpu_custom_call.1} parent=1 // pred_check_branch
      %20 = sbr.rel (0) target = $region13
    $region12: #{tpu_custom_call.1} parent=1 // pred_region
      %21 = dma.done [#allocation4], 16
    $region13: #{tpu_custom_call.1} parent=1 // pred_fallthru
      _
    %22 = sfence
    %s23 = sld [smem:[#allocation2]]
    %s24 = sld [smem:[#allocation2 + $0x1]]
    %v25 = vld [vmem:[%s1] sm:$0x1]
    %v26 = vstv %s23
    %v27 = vmul.f32 %v25, %v26
    %v28 = vstv %s24
    %v29 = vadd.f32 %v27, %v28
    %30 = vst [vmem:[#allocation5] sm:$0x1] %v29
    // Predicated region
    $region14: #{tpu_custom_call.1} parent=1 // pred_check
      _
    $region15: #{tpu_custom_call.1} parent=1 // pred_check_branch
      %32 = sbr.rel (0) target = $region17
    $region16: #{tpu_custom_call.1} parent=1 // pred_region
      %s34 = ssub.s32 16, 16
      %35 = vsyncadd [#allocation3], %s34
      %s37 = sshll.u32 [#allocation5], 4
      %s38 = int_to_ptr.vmem [resolvable:$true] %s37
      %40 = dma.vmem_to_hbm [thread:$0]  %s38, 16, %s2, [#allocation3]
    $region17: #{tpu_custom_call.1} parent=1 // pred_fallthru
      _
    // Predicated region
    $region18: #{tpu_custom_call.1} parent=1 // pred_check
      _
    $region19: #{tpu_custom_call.1} parent=1 // pred_check_branch
      %42 = sbr.rel (0) target = $region21
    $region20: #{tpu_custom_call.1} parent=1 // pred_region
      %43 = dma.done [#allocation3], 16
    $region21: #{tpu_custom_call.1} parent=1 // pred_fallthru
      _
    %44 = vsyncpa [#allocation3], 1
    %45 = vsyncpa [#allocation4], 1

</llo_original>
